<compile_context>
chip_gen: v7x
topology: tpu7x:2x2x1
jax: 0.10.0
libtpu: 0.0.40
codegen_flags: <defaults>
</compile_context>

<pallas_src>
import functools

import jax
import jax.numpy as jnp
from jax.experimental import pallas as pl
from jax.experimental.pallas import tpu as pltpu

HIDDEN = 128


def _dqn_rnn_kernel(x_ref, wih1_ref, w_ref, b_ref, out_ref,
                    *, seq, batch, bpad, n_actions):
    """Whole DQN_RNN forward for one call.

    x_ref   : (seq*bpad, n_obs)   bf16  row t*bpad+b = x[t, b]; rows >= batch are zero pad
    wih1_ref: (n_obs, HIDDEN)     bf16  = W_ih1^T
    w_ref   : (HIDDEN, 3*HIDDEN)  bf16  = [W_hh1^T | W_ih2^T | W_dense^T zero-padded to 128 lanes]
    b_ref   : (3, HIDDEN)         f32   rows: b_ih1+b_hh1, b_ih2+b_hh2, b_dense zero-padded
    out_ref : (batch, n_actions)  f32   softmax over the BATCH axis (spec quirk)
    """
    b = b_ref[...]
    b1 = b[0:1, :]
    b2 = b[1:2, :]
    bd = b[2:3, :]

    # Hoisted input projection (+ fused rnn1 bias): one matmul covers all steps.
    pre_x = (jnp.dot(x_ref[...], wih1_ref[...],
                     preferred_element_type=jnp.float32)
             + b1)                                        # (seq*bpad, H) f32

    # rnn1 recurrence: fully unrolled (seq is static), h carried in vregs; each
    # per-step slab is a whole sublane-aligned (bpad, 128) f32 tile.
    whh1 = w_ref[:, 0:HIDDEN]                             # (H, H) bf16, load once
    h = jnp.zeros((bpad, HIDDEN), jnp.float32)
    for t in range(seq):
        rec = jnp.dot(h.astype(whh1.dtype), whh1,
                      preferred_element_type=jnp.float32)
        h = jnp.tanh(pre_x[t * bpad:(t + 1) * bpad, :] + rec)

    # rnn2 over the length-1 sequence `hidden1`, zero initial state:
    #   h2 = tanh(h1 @ W_ih2^T + b_ih2 + b_hh2)      (W_hh2 @ 0 == 0)
    wih2 = w_ref[:, HIDDEN:2 * HIDDEN]
    h2 = jnp.tanh(jnp.dot(h.astype(wih2.dtype), wih2,
                          preferred_element_type=jnp.float32) + b2)

    # dense (weights zero-padded to 128 output lanes -> tile-aligned matmul)
    wd = w_ref[:, 2 * HIDDEN:3 * HIDDEN]
    logits_full = (jnp.dot(h2.astype(wd.dtype), wd,
                           preferred_element_type=jnp.float32)
                   + bd)                                  # (bpad, H) f32

    # Drop padded batch rows / action lanes BEFORE the softmax: PyTorch
    # Softmax(dim=1) on a (1,B,A) tensor normalizes over the batch axis, so the
    # padded rows must not contribute.
    logits = logits_full[:batch, :n_actions]
    m = jnp.max(logits, axis=0, keepdims=True)
    e = jnp.exp(logits - m)
    # Exact normalization (approx reciprocal is not accurate enough to make
    # each column sum to 1 within 1e-3).
    out_ref[...] = e / jnp.sum(e, axis=0, keepdims=True)


def init_params(key, n_observations, n_actions):
    """Deterministic PyTorch-style init: U(-1/sqrt(fan), 1/sqrt(fan))."""
    ks = jax.random.split(key, 11)
    s_rnn = 1.0 / jnp.sqrt(jnp.float32(HIDDEN))
    s_lin = 1.0 / jnp.sqrt(jnp.float32(HIDDEN))

    def u(k, shape, s):
        return jax.random.uniform(k, shape, jnp.float32, -s, s)

    return dict(
        w_ih1=u(ks[0], (HIDDEN, n_observations), s_rnn),
        w_hh1=u(ks[1], (HIDDEN, HIDDEN), s_rnn),
        b_ih1=u(ks[2], (HIDDEN,), s_rnn),
        b_hh1=u(ks[3], (HIDDEN,), s_rnn),
        w_ih2=u(ks[4], (HIDDEN, HIDDEN), s_rnn),
        w_hh2=u(ks[5], (HIDDEN, HIDDEN), s_rnn),   # unused at runtime (h0 == 0)
        b_ih2=u(ks[6], (HIDDEN,), s_rnn),
        b_hh2=u(ks[7], (HIDDEN,), s_rnn),
        w_dense=u(ks[8], (n_actions, HIDDEN), s_lin),
        b_dense=u(ks[9], (n_actions,), s_lin),
    )


def prepare_params(params, n_actions):
    """One-time layout/dtype prep, kept OFF the per-inference critical path:
    transpose weights, cast MXU operands to bf16, fuse biases, pack operands."""
    wih1_t = params["w_ih1"].T.astype(jnp.bfloat16)                 # (n_obs, H)
    whh1_t = params["w_hh1"].T.astype(jnp.bfloat16)                 # (H, H)
    wih2_t = params["w_ih2"].T.astype(jnp.bfloat16)                 # (H, H)
    wd_t = params["w_dense"].T.astype(jnp.bfloat16)                 # (H, A)
    wd_pad = jnp.zeros((HIDDEN, HIDDEN), jnp.bfloat16).at[:, :n_actions].set(wd_t)
    w_cat = jnp.concatenate([whh1_t, wih2_t, wd_pad], axis=1)       # (H, 3H) bf16

    b1 = (params["b_ih1"] + params["b_hh1"]).astype(jnp.float32)
    b2 = (params["b_ih2"] + params["b_hh2"]).astype(jnp.float32)    # W_hh2 @ 0 == 0
    bd = jnp.zeros((HIDDEN,), jnp.float32).at[:n_actions].set(params["b_dense"])
    b_cat = jnp.stack([b1, b2, bd], axis=0)                         # (3, H) f32

    return dict(wih1_t=wih1_t, w_cat=w_cat, b_cat=b_cat)


@functools.partial(jax.jit, static_argnames=("n_actions",))
def dqn_rnn_forward(x, prepped, n_actions):
    seq, batch, n_obs = x.shape
    bpad = ((batch + 7) // 8) * 8        # pad batch to a sublane multiple

    # Pure layout plumbing: pad batch rows with zeros (dropped in-kernel before
    # the softmax), cast to bf16 for the MXU, flatten so the kernel projects
    # every timestep with a single matmul.
    x_pad = jnp.pad(x.astype(jnp.bfloat16), ((0, 0), (0, bpad - batch), (0, 0)))
    x_flat = x_pad.reshape(seq * bpad, n_obs)

    vmem = pl.BlockSpec(memory_space=pltpu.MemorySpace.VMEM)
    kernel = functools.partial(_dqn_rnn_kernel, seq=seq, batch=batch,
                               bpad=bpad, n_actions=n_actions)
    out = pl.pallas_call(
        kernel,
        out_shape=jax.ShapeDtypeStruct((batch, n_actions), jnp.float32),
        in_specs=[vmem] * 4,
        out_specs=vmem,
    )(x_flat, prepped["wih1_t"], prepped["w_cat"], prepped["b_cat"])

    # Match the PyTorch output shape (num_layers=1, batch, n_actions).
    return out.reshape(1, batch, n_actions)


def dqn_rnn_reference(x, params):
    """Pure-JAX f32 reference mirroring the PyTorch forward."""
    seq, batch, _ = x.shape
    h = jnp.zeros((batch, HIDDEN), jnp.float32)
    for t in range(seq):
        h = jnp.tanh(x[t] @ params["w_ih1"].T + params["b_ih1"]
                     + h @ params["w_hh1"].T + params["b_hh1"])
    h2 = jnp.tanh(h @ params["w_ih2"].T + params["b_ih2"]
                  + jnp.zeros_like(h) @ params["w_hh2"].T + params["b_hh2"])
    logits = (h2 @ params["w_dense"].T + params["b_dense"])[None]   # (1, B, A)
    return jax.nn.softmax(logits, axis=1)                           # dim=1 == batch


if __name__ == "__main__":
    n_observations = 5
    n_actions = 3
    seq, batch = 8, 2

    key = jax.random.PRNGKey(0)
    k_params, k_x = jax.random.split(key)
    params = init_params(k_params, n_observations, n_actions)
    prepped = prepare_params(params, n_actions)       # one-time weight prep
    x = jax.random.normal(k_x, (seq, batch, n_observations), jnp.float32)

    out = dqn_rnn_forward(x, prepped, n_actions)
    out = jax.block_until_ready(out)

    ref = dqn_rnn_reference(x, params)
    assert out.shape == (1, batch, n_actions)
    # bf16 MXU operands through 8 serial tanh steps => loose tolerance vs f32.
    assert jnp.allclose(out, ref, atol=1e-2, rtol=1e-2)
    # Softmax(dim=1) => each (action) column sums to 1 over the batch axis.
    assert jnp.allclose(jnp.sum(out, axis=1), 1.0, atol=1e-3)

    print("KERNEL_OK")
</pallas_src>

<mosaic_0001>
module attributes {stable_mosaic.version = 11 : i64} {
  func.func @_dqn_rnn_kernel(%arg0: memref<64x5xbf16, #tpu.memory_space<vmem>>, %arg1: memref<5x128xbf16, #tpu.memory_space<vmem>>, %arg2: memref<128x384xbf16, #tpu.memory_space<vmem>>, %arg3: memref<3x128xf32, #tpu.memory_space<vmem>>, %arg4: memref<2x3xf32, #tpu.memory_space<vmem>>) attributes {dimension_semantics = [], scalar_prefetch = 0 : i64, scratch_operands = 0 : i64, tpu.core_type = #tpu.core_type<tc>} {
    %c0 = arith.constant 0 : index
    %c0_0 = arith.constant 0 : index
    %0 = vector.load %arg3[%c0, %c0_0] : memref<3x128xf32, #tpu.memory_space<vmem>>, vector<3x128xf32>
    %1 = vector.extract_strided_slice %0 {offsets = [0, 0], sizes = [1, 128], strides = [1, 1]} : vector<3x128xf32> to vector<1x128xf32>
    %2 = vector.extract_strided_slice %0 {offsets = [1, 0], sizes = [1, 128], strides = [1, 1]} : vector<3x128xf32> to vector<1x128xf32>
    %3 = vector.extract_strided_slice %0 {offsets = [2, 0], sizes = [1, 128], strides = [1, 1]} : vector<3x128xf32> to vector<1x128xf32>
    %c0_1 = arith.constant 0 : index
    %c0_2 = arith.constant 0 : index
    %4 = vector.load %arg0[%c0_1, %c0_2] : memref<64x5xbf16, #tpu.memory_space<vmem>>, vector<64x5xbf16>
    %c0_3 = arith.constant 0 : index
    %c0_4 = arith.constant 0 : index
    %5 = vector.load %arg1[%c0_3, %c0_4] : memref<5x128xbf16, #tpu.memory_space<vmem>>, vector<5x128xbf16>
    %cst = arith.constant dense<0.000000e+00> : vector<64x128xf32>
    %6 = tpu.matmul %4, %5, %cst {dimension_numbers = #tpu.dot_dimension_numbers<[1], [0], [0], [1], [0, 0, 1, 1], [], []>} : vector<64x5xbf16>, vector<5x128xbf16>, vector<64x128xf32> -> vector<64x128xf32>
    %7 = vector.broadcast %1 : vector<1x128xf32> to vector<64x128xf32>
    %8 = arith.addf %6, %7 : vector<64x128xf32>
    %c0_5 = arith.constant 0 : index
    %c0_6 = arith.constant 0 : index
    %9 = vector.load %arg2[%c0_5, %c0_6] : memref<128x384xbf16, #tpu.memory_space<vmem>>, vector<128x128xbf16>
    %cst_7 = arith.constant 0.000000e+00 : f32
    %10 = vector.broadcast %cst_7 : f32 to vector<8x128xf32>
    %11 = arith.truncf %10 : vector<8x128xf32> to vector<8x128xbf16>
    %cst_8 = arith.constant dense<0.000000e+00> : vector<8x128xf32>
    %12 = tpu.matmul %11, %9, %cst_8 {dimension_numbers = #tpu.dot_dimension_numbers<[1], [0], [0], [1], [0, 0, 1, 1], [], []>} : vector<8x128xbf16>, vector<128x128xbf16>, vector<8x128xf32> -> vector<8x128xf32>
    %13 = vector.extract_strided_slice %8 {offsets = [0, 0], sizes = [8, 128], strides = [1, 1]} : vector<64x128xf32> to vector<8x128xf32>
    %14 = arith.addf %13, %12 : vector<8x128xf32>
    %15 = math.tanh %14 : vector<8x128xf32>
    %16 = arith.truncf %15 : vector<8x128xf32> to vector<8x128xbf16>
    %cst_9 = arith.constant dense<0.000000e+00> : vector<8x128xf32>
    %17 = tpu.matmul %16, %9, %cst_9 {dimension_numbers = #tpu.dot_dimension_numbers<[1], [0], [0], [1], [0, 0, 1, 1], [], []>} : vector<8x128xbf16>, vector<128x128xbf16>, vector<8x128xf32> -> vector<8x128xf32>
    %18 = vector.extract_strided_slice %8 {offsets = [8, 0], sizes = [8, 128], strides = [1, 1]} : vector<64x128xf32> to vector<8x128xf32>
    %19 = arith.addf %18, %17 : vector<8x128xf32>
    %20 = math.tanh %19 : vector<8x128xf32>
    %21 = arith.truncf %20 : vector<8x128xf32> to vector<8x128xbf16>
    %cst_10 = arith.constant dense<0.000000e+00> : vector<8x128xf32>
    %22 = tpu.matmul %21, %9, %cst_10 {dimension_numbers = #tpu.dot_dimension_numbers<[1], [0], [0], [1], [0, 0, 1, 1], [], []>} : vector<8x128xbf16>, vector<128x128xbf16>, vector<8x128xf32> -> vector<8x128xf32>
    %23 = vector.extract_strided_slice %8 {offsets = [16, 0], sizes = [8, 128], strides = [1, 1]} : vector<64x128xf32> to vector<8x128xf32>
    %24 = arith.addf %23, %22 : vector<8x128xf32>
    %25 = math.tanh %24 : vector<8x128xf32>
    %26 = arith.truncf %25 : vector<8x128xf32> to vector<8x128xbf16>
    %cst_11 = arith.constant dense<0.000000e+00> : vector<8x128xf32>
    %27 = tpu.matmul %26, %9, %cst_11 {dimension_numbers = #tpu.dot_dimension_numbers<[1], [0], [0], [1], [0, 0, 1, 1], [], []>} : vector<8x128xbf16>, vector<128x128xbf16>, vector<8x128xf32> -> vector<8x128xf32>
    %28 = vector.extract_strided_slice %8 {offsets = [24, 0], sizes = [8, 128], strides = [1, 1]} : vector<64x128xf32> to vector<8x128xf32>
    %29 = arith.addf %28, %27 : vector<8x128xf32>
    %30 = math.tanh %29 : vector<8x128xf32>
    %31 = arith.truncf %30 : vector<8x128xf32> to vector<8x128xbf16>
    %cst_12 = arith.constant dense<0.000000e+00> : vector<8x128xf32>
    %32 = tpu.matmul %31, %9, %cst_12 {dimension_numbers = #tpu.dot_dimension_numbers<[1], [0], [0], [1], [0, 0, 1, 1], [], []>} : vector<8x128xbf16>, vector<128x128xbf16>, vector<8x128xf32> -> vector<8x128xf32>
    %33 = vector.extract_strided_slice %8 {offsets = [32, 0], sizes = [8, 128], strides = [1, 1]} : vector<64x128xf32> to vector<8x128xf32>
    %34 = arith.addf %33, %32 : vector<8x128xf32>
    %35 = math.tanh %34 : vector<8x128xf32>
    %36 = arith.truncf %35 : vector<8x128xf32> to vector<8x128xbf16>
    %cst_13 = arith.constant dense<0.000000e+00> : vector<8x128xf32>
    %37 = tpu.matmul %36, %9, %cst_13 {dimension_numbers = #tpu.dot_dimension_numbers<[1], [0], [0], [1], [0, 0, 1, 1], [], []>} : vector<8x128xbf16>, vector<128x128xbf16>, vector<8x128xf32> -> vector<8x128xf32>
    %38 = vector.extract_strided_slice %8 {offsets = [40, 0], sizes = [8, 128], strides = [1, 1]} : vector<64x128xf32> to vector<8x128xf32>
    %39 = arith.addf %38, %37 : vector<8x128xf32>
    %40 = math.tanh %39 : vector<8x128xf32>
    %41 = arith.truncf %40 : vector<8x128xf32> to vector<8x128xbf16>
    %cst_14 = arith.constant dense<0.000000e+00> : vector<8x128xf32>
    %42 = tpu.matmul %41, %9, %cst_14 {dimension_numbers = #tpu.dot_dimension_numbers<[1], [0], [0], [1], [0, 0, 1, 1], [], []>} : vector<8x128xbf16>, vector<128x128xbf16>, vector<8x128xf32> -> vector<8x128xf32>
    %43 = vector.extract_strided_slice %8 {offsets = [48, 0], sizes = [8, 128], strides = [1, 1]} : vector<64x128xf32> to vector<8x128xf32>
    %44 = arith.addf %43, %42 : vector<8x128xf32>
    %45 = math.tanh %44 : vector<8x128xf32>
    %46 = arith.truncf %45 : vector<8x128xf32> to vector<8x128xbf16>
    %cst_15 = arith.constant dense<0.000000e+00> : vector<8x128xf32>
    %47 = tpu.matmul %46, %9, %cst_15 {dimension_numbers = #tpu.dot_dimension_numbers<[1], [0], [0], [1], [0, 0, 1, 1], [], []>} : vector<8x128xbf16>, vector<128x128xbf16>, vector<8x128xf32> -> vector<8x128xf32>
    %48 = vector.extract_strided_slice %8 {offsets = [56, 0], sizes = [8, 128], strides = [1, 1]} : vector<64x128xf32> to vector<8x128xf32>
    %49 = arith.addf %48, %47 : vector<8x128xf32>
    %50 = math.tanh %49 : vector<8x128xf32>
    %c0_16 = arith.constant 0 : index
    %c128 = arith.constant 128 : index
    %51 = vector.load %arg2[%c0_16, %c128] : memref<128x384xbf16, #tpu.memory_space<vmem>>, vector<128x128xbf16>
    %52 = arith.truncf %50 : vector<8x128xf32> to vector<8x128xbf16>
    %cst_17 = arith.constant dense<0.000000e+00> : vector<8x128xf32>
    %53 = tpu.matmul %52, %51, %cst_17 {dimension_numbers = #tpu.dot_dimension_numbers<[1], [0], [0], [1], [0, 0, 1, 1], [], []>} : vector<8x128xbf16>, vector<128x128xbf16>, vector<8x128xf32> -> vector<8x128xf32>
    %54 = vector.broadcast %2 : vector<1x128xf32> to vector<8x128xf32>
    %55 = arith.addf %53, %54 : vector<8x128xf32>
    %56 = math.tanh %55 : vector<8x128xf32>
    %c0_18 = arith.constant 0 : index
    %c256 = arith.constant 256 : index
    %57 = vector.load %arg2[%c0_18, %c256] : memref<128x384xbf16, #tpu.memory_space<vmem>>, vector<128x128xbf16>
    %58 = arith.truncf %56 : vector<8x128xf32> to vector<8x128xbf16>
    %cst_19 = arith.constant dense<0.000000e+00> : vector<8x128xf32>
    %59 = tpu.matmul %58, %57, %cst_19 {dimension_numbers = #tpu.dot_dimension_numbers<[1], [0], [0], [1], [0, 0, 1, 1], [], []>} : vector<8x128xbf16>, vector<128x128xbf16>, vector<8x128xf32> -> vector<8x128xf32>
    %60 = vector.broadcast %3 : vector<1x128xf32> to vector<8x128xf32>
    %61 = arith.addf %59, %60 : vector<8x128xf32>
    %62 = vector.extract_strided_slice %61 {offsets = [0, 0], sizes = [2, 3], strides = [1, 1]} : vector<8x128xf32> to vector<2x3xf32>
    %cst_20 = arith.constant dense<0xFF800000> : vector<3xf32>
    %63 = vector.multi_reduction <maximumf>, %62, %cst_20 [0] : vector<2x3xf32> to vector<3xf32>
    %64 = vector.shape_cast %63 : vector<3xf32> to vector<1x3xf32>
    %65 = vector.broadcast %64 : vector<1x3xf32> to vector<2x3xf32>
    %66 = arith.subf %62, %65 : vector<2x3xf32>
    %67 = math.exp %66 : vector<2x3xf32>
    %cst_21 = arith.constant dense<0.000000e+00> : vector<3xf32>
    %68 = vector.multi_reduction <add>, %67, %cst_21 [0] : vector<2x3xf32> to vector<3xf32>
    %69 = vector.shape_cast %68 : vector<3xf32> to vector<1x3xf32>
    %70 = vector.broadcast %69 : vector<1x3xf32> to vector<2x3xf32>
    %71 = arith.divf %67, %70 : vector<2x3xf32>
    %c0_22 = arith.constant 0 : index
    %c0_23 = arith.constant 0 : index
    %72 = vector.load %arg4[%c0_22, %c0_23] : memref<2x3xf32, #tpu.memory_space<vmem>>, vector<2x3xf32>
    tpu.vector_store %arg4[%c0_22, %c0_23], %71 {strides = array<i32>} : memref<2x3xf32, #tpu.memory_space<vmem>>, vector<2x3xf32>,
    return
  }
}

</mosaic_0001>

<llo_original>
// kernel: dqn_rnn_forward.1
$region0: #{dqn_rnn_forward.1}
  #allocation0 [shape = 'u32[]', space=smem, size = 0x4, offset = 0x4, fixed_abs, tag = 'smem constant byte address 0x4 - core index']
  #allocation1 [shape = 'u32[144,128]{1,0:T(1,128)}', space=vmem, size = 0x12000, scoped, tag = 'internal scratch']
  %s0 = inlined_call_operand.vmem [shape: bf16[64,5], index: 0, kind: input, shape index: {}]
  %s1 = inlined_call_operand.vmem [shape: bf16[5,128], index: 1, kind: input, shape index: {}]
  %s2 = inlined_call_operand.hbm [shape: bf16[128,384], index: 2, kind: input, shape index: {}]
  %s3 = inlined_call_operand.vmem [shape: f32[3,128], index: 3, kind: input, shape index: {}]
  %s4 = inlined_call_operand.hbm [shape: f32[2,3], index: 4, kind: output, shape index: {}]
  %s5 = sld [smem:[#allocation0]]
  $region30: #{dqn_rnn_forward.1} parent=0
    _
  %s7 = ssub.s32 1, %s5
  %s8 = scalar_select 0, %s7, %s5
  $region1: #{dqn_rnn_forward.1} parent=0
    #allocation2 [shape = 'u8[98304]{0}', space=vmem, size = 0x18000, scoped, tag = 'input window, operand 2, single buffered']
    #allocation3 [shape = 's32[1]{0}', space=sflag, size = 0x4, scoped, tag = 'scoped memory for dqn_rnn_forward.1']
    #allocation4 [shape = 's32[1]{0}', space=sflag, size = 0x4, scoped, tag = 'scoped memory for dqn_rnn_forward.1']
    #allocation5 [shape = 'u8[1024]{0}', space=vmem, size = 0x400, scoped, tag = 'output window, operand 0, single buffered']
    %9 = vsyncpa [#allocation3], 0
    %10 = vsyncpa [#allocation4], 0
    // Predicated region
    $region2: #{dqn_rnn_forward.1} parent=1 // pred_check
      _
    $region3: #{dqn_rnn_forward.1} parent=1 // pred_check_branch
      %12 = sbr.rel (0) target = $region5
    $region4: #{dqn_rnn_forward.1} parent=1 // pred_region
      _
    $region5: #{dqn_rnn_forward.1} parent=1 // pred_fallthru
      _
    // Predicated region
    $region6: #{dqn_rnn_forward.1} parent=1 // pred_check
      _
    $region7: #{dqn_rnn_forward.1} parent=1 // pred_check_branch
      %14 = sbr.rel (0) target = $region9
    $region8: #{dqn_rnn_forward.1} parent=1 // pred_region
      _
    $region9: #{dqn_rnn_forward.1} parent=1 // pred_fallthru
      _
    // Predicated region
    $region10: #{dqn_rnn_forward.1} parent=1 // pred_check
      _
    $region11: #{dqn_rnn_forward.1} parent=1 // pred_check_branch
      %16 = sbr.rel (0) target = $region13
    $region12: #{dqn_rnn_forward.1} parent=1 // pred_region
      %s18 = ssub.s32 3072, 3072
      %19 = vsyncadd [#allocation3], %s18
      %s20 = sshll.u32 [#allocation2], 4
      %s21 = int_to_ptr.vmem [resolvable:$true] %s20
      %26 = dma.hbm_to_vmem [thread:$0]  %s2, 3072, %s21, [#allocation3], 192, 192, 12
    $region13: #{dqn_rnn_forward.1} parent=1 // pred_fallthru
      _
    // Predicated region
    $region14: #{dqn_rnn_forward.1} parent=1 // pred_check
      _
    $region15: #{dqn_rnn_forward.1} parent=1 // pred_check_branch
      %28 = sbr.rel (0) target = $region17
    $region16: #{dqn_rnn_forward.1} parent=1 // pred_region
      _
    $region17: #{dqn_rnn_forward.1} parent=1 // pred_fallthru
      _
    // Predicated region
    $region18: #{dqn_rnn_forward.1} parent=1 // pred_check
      _
    $region19: #{dqn_rnn_forward.1} parent=1 // pred_check_branch
      %30 = sbr.rel (0) target = $region21
    $region20: #{dqn_rnn_forward.1} parent=1 // pred_region
      %31 = dma.done [#allocation3], 3072
    $region21: #{dqn_rnn_forward.1} parent=1 // pred_fallthru
      _
    %v33 = vld [vmem:[%s3] sm:$0x7]
    %v34 = vld [vmem:[%s0] sm:$0xf]
    %v35 = vld [vmem:[%s0 + $0x4] sm:$0xf]
    %v36 = vld [vmem:[%s0 + $0x8] sm:$0xf]
    %v37 = vld [vmem:[%s0 + $0xc] sm:$0xf]
    %v38 = vld [vmem:[%s0 + $0x10] sm:$0xf]
    %v39 = vld [vmem:[%s0 + $0x14] sm:$0xf]
    %v40 = vld [vmem:[%s0 + $0x18] sm:$0xf]
    %v41 = vld [vmem:[%s0 + $0x1c] sm:$0xf]
    %v42 = vld [vmem:[%s1] sm:$0x7]
    %v43 = vlaneseq
    %v44 = vshrl.u32 %v43, 7
    %v45 = vsub.s32 0, %v44
    %v46 = vrot.slane %v33, %v45
    %v55 = vunpack.c.l.b16 %v34
    %v56 = vunpack.c.l.b16 %v35
    %v57 = vunpack.c.l.b16 %v36
    %v58 = vunpack.c.l.b16 %v37
    %v59 = vunpack.c.l.b16 %v38
    %v60 = vunpack.c.l.b16 %v39
    %v61 = vunpack.c.l.b16 %v40
    %v62 = vunpack.c.l.b16 %v41
    %v63 = vpack.c.b16 %v56, %v55
    %v64 = vpack.c.b16 %v58, %v57
    %v65 = vpack.c.b16 %v60, %v59
    %v66 = vpack.c.b16 %v62, %v61
    %vm67 = vcmask 39936
    %v69 = vsel %vm67, %v63, 0
    %v72 = vsel %vm67, %v64, 0
    %v75 = vsel %vm67, %v65, 0
    %v78 = vsel %vm67, %v66, 0
    %vm80 = vcmask 1041408
    %vm81 = vcmask 1042432
    %v82 = vsel %vm80, 4294967295, 65535
    %v83 = vsel %vm81, %v82, 0
    %v85 = vand.u32 %v42, %v83
    %87 = vmatprep.subr.bf16.mxu0 0
    %88 = vmatpush1.bf16.msra.mxu0 %v85
    %89 = vmatprep.subr.bf16.mxu0 0
    %90 = vmatpush1.bf16.msra.mxu0 0
    %91 = vmatprep.subr.bf16.mxu0 0
    %92 = vmatpush1.bf16.msra.mxu0 0
    %93 = vmatprep.subr.bf16.mxu0 0
    %94 = vmatpush1.bf16.msra.mxu0 0
    %95 = vmatprep.subr.bf16.mxu0 0
    %96 = vmatpush1.bf16.msra.mxu0 0
    %97 = vmatprep.subr.bf16.mxu0 0
    %98 = vmatpush1.bf16.msra.mxu0 0
    %99 = vmatprep.subr.bf16.mxu0 0
    %100 = vmatpush1.bf16.msra.mxu0 0
    %101 = vmatprep.subr.bf16.mxu0 0
    %102 = vmatpush1.bf16.msra.mxu0 0
    %103 = vmatprep.subr.bf16.mxu0 0
    %104 = vmatpush1.bf16.msra.mxu0 0
    %105 = vmatprep.subr.bf16.mxu0 0
    %106 = vmatpush1.bf16.msra.mxu0 0
    %107 = vmatprep.subr.bf16.mxu0 0
    %108 = vmatpush1.bf16.msra.mxu0 0
    %109 = vmatprep.subr.bf16.mxu0 0
    %110 = vmatpush1.bf16.msra.mxu0 0
    %111 = vmatprep.subr.bf16.mxu0 0
    %112 = vmatpush1.bf16.msra.mxu0 0
    %113 = vmatprep.subr.bf16.mxu0 0
    %114 = vmatpush1.bf16.msra.mxu0 0
    %115 = vmatprep.subr.bf16.mxu0 0
    %116 = vmatpush1.bf16.msra.mxu0 0
    %117 = vmatprep.subr.bf16.mxu0 0
    %118 = vmatpush1.bf16.msra.mxu0 0
    %119 = vmatprep.mubr.bf16.mxu0 0
    %120 = vmatmul.mubr.bf16.gmra.mrb[0].mxu0 %v69
    %v121 = vpop.f32.mrb[0].mxu0
    %v122 = vadd.f32 %v46, %v121
    %v123 = vpop.f32.mrb[0].mxu0
    %v124 = vpop.f32.mrb[0].mxu0
    %v125 = vadd.f32 %v46, %v124
    %v126 = vpop.f32.mrb[0].mxu0
    %127 = vmatprep.mubr.bf16.mxu0 0
    %128 = vmatmul.mubr.bf16.gmra.mrb[0].mxu0 %v72
    %v129 = vpop.f32.mrb[0].mxu0
    %v130 = vadd.f32 %v46, %v129
    %v131 = vpop.f32.mrb[0].mxu0
    %v132 = vpop.f32.mrb[0].mxu0
    %v133 = vadd.f32 %v46, %v132
    %v134 = vpop.f32.mrb[0].mxu0
    %135 = vmatprep.mubr.bf16.mxu0 0
    %136 = vmatmul.mubr.bf16.gmra.mrb[0].mxu0 %v75
    %v137 = vpop.f32.mrb[0].mxu0
    %v138 = vadd.f32 %v46, %v137
    %v139 = vpop.f32.mrb[0].mxu0
    %v140 = vpop.f32.mrb[0].mxu0
    %v141 = vadd.f32 %v46, %v140
    %v142 = vpop.f32.mrb[0].mxu0
    %143 = vmatprep.mubr.bf16.mxu0 0
    %144 = vmatmul.mubr.bf16.gmra.mrb[0].mxu0 %v78
    %v145 = vpop.f32.mrb[0].mxu0
    %v146 = vadd.f32 %v46, %v145
    %v147 = vpop.f32.mrb[0].mxu0
    %v148 = vpop.f32.mrb[0].mxu0
    %v149 = vadd.f32 %v46, %v148
    %v150 = vpop.f32.mrb[0].mxu0
    %151 = vdwg.mxu0
    %v152 = vld [vmem:[#allocation2] sm:$0xf]
    %v153 = vld [vmem:[#allocation2 + $0xc] sm:$0xf]
    %v154 = vld [vmem:[#allocation2 + $0x18] sm:$0xf]
    %v155 = vld [vmem:[#allocation2 + $0x24] sm:$0xf]
    %v156 = vld [vmem:[#allocation2 + $0x30] sm:$0xf]
    %v157 = vld [vmem:[#allocation2 + $0x3c] sm:$0xf]
    %v158 = vld [vmem:[#allocation2 + $0x48] sm:$0xf]
    %v159 = vld [vmem:[#allocation2 + $0x54] sm:$0xf]
    %v160 = vld [vmem:[#allocation2 + $0x60] sm:$0xf]
    %v161 = vld [vmem:[#allocation2 + $0x6c] sm:$0xf]
    %v162 = vld [vmem:[#allocation2 + $0x78] sm:$0xf]
    %v163 = vld [vmem:[#allocation2 + $0x84] sm:$0xf]
    %v164 = vld [vmem:[#allocation2 + $0x90] sm:$0xf]
    %v165 = vld [vmem:[#allocation2 + $0x9c] sm:$0xf]
    %v166 = vld [vmem:[#allocation2 + $0xa8] sm:$0xf]
    %v167 = vld [vmem:[#allocation2 + $0xb4] sm:$0xf]
    %v184 = vunpack.c.l.b16 %v152
    %v185 = vunpack.c.l.b16 %v153
    %v186 = vunpack.c.l.b16 %v154
    %v187 = vunpack.c.l.b16 %v155
    %v188 = vunpack.c.l.b16 %v156
    %v189 = vunpack.c.l.b16 %v157
    %v190 = vunpack.c.l.b16 %v158
    %v191 = vunpack.c.l.b16 %v159
    %v192 = vunpack.c.l.b16 %v160
    %v193 = vunpack.c.l.b16 %v161
    %v194 = vunpack.c.l.b16 %v162
    %v195 = vunpack.c.l.b16 %v163
    %v196 = vunpack.c.l.b16 %v164
    %v197 = vunpack.c.l.b16 %v165
    %v198 = vunpack.c.l.b16 %v166
    %v199 = vunpack.c.l.b16 %v167
    %v200 = vpack.c.b16 %v185, %v184
    %v201 = vpack.c.b16 %v187, %v186
    %v202 = vpack.c.b16 %v189, %v188
    %v203 = vpack.c.b16 %v191, %v190
    %v204 = vpack.c.b16 %v193, %v192
    %v205 = vpack.c.b16 %v195, %v194
    %v206 = vpack.c.b16 %v197, %v196
    %v207 = vpack.c.b16 %v199, %v198
    %216 = vmatprep.subr.bf16.mxu0 0
    %217 = vmatpush1.bf16.msra.mxu0 %v200
    %218 = vmatprep.subr.bf16.mxu0 0
    %219 = vmatpush1.bf16.msra.mxu0 %v201
    %220 = vmatprep.subr.bf16.mxu0 0
    %221 = vmatpush1.bf16.msra.mxu0 %v202
    %222 = vmatprep.subr.bf16.mxu0 0
    %223 = vmatpush1.bf16.msra.mxu0 %v203
    %224 = vmatprep.subr.bf16.mxu0 0
    %225 = vmatpush1.bf16.msra.mxu0 %v204
    %226 = vmatprep.subr.bf16.mxu0 0
    %227 = vmatpush1.bf16.msra.mxu0 %v205
    %228 = vmatprep.subr.bf16.mxu0 0
    %229 = vmatpush1.bf16.msra.mxu0 %v206
    %230 = vmatprep.subr.bf16.mxu0 0
    %231 = vmatpush1.bf16.msra.mxu0 %v207
    %232 = vmatprep.subr.bf16.mxu0 0
    %233 = vmatpush1.bf16.msra.mxu0 0
    %234 = vmatprep.subr.bf16.mxu0 0
    %235 = vmatpush1.bf16.msra.mxu0 0
    %236 = vmatprep.subr.bf16.mxu0 0
    %237 = vmatpush1.bf16.msra.mxu0 0
    %238 = vmatprep.subr.bf16.mxu0 0
    %239 = vmatpush1.bf16.msra.mxu0 0
    %240 = vmatprep.subr.bf16.mxu0 0
    %241 = vmatpush1.bf16.msra.mxu0 0
    %242 = vmatprep.subr.bf16.mxu0 0
    %243 = vmatpush1.bf16.msra.mxu0 0
    %244 = vmatprep.subr.bf16.mxu0 0
    %245 = vmatpush1.bf16.msra.mxu0 0
    %246 = vmatprep.subr.bf16.mxu0 0
    %247 = vmatpush1.bf16.msra.mxu0 0
    %248 = vmatprep.mubr.bf16.mxu0 0
    %249 = vmatmul.mubr.bf16.gmra.mrb[0].mxu0 0
    %v250 = vpop.f32.mrb[0].mxu0
    %v251 = vadd.f32 0.0, %v250
    %v252 = vpop.f32.mrb[0].mxu0
    %v253 = vpop.f32.mrb[0].mxu0
    %v254 = vpop.f32.mrb[0].mxu0
    %255 = vdwg.mxu0
    %v256 = vadd.f32 %v122, %v251
    %v257 = vtanh.pop %v256
    %v258 = vpack.c.bf16 %v257, %v257
    %259 = vmatprep.subr.bf16.mxu0 0
    %260 = vmatpush1.bf16.msra.mxu0 %v200
    %261 = vmatprep.subr.bf16.mxu0 0
    %262 = vmatpush1.bf16.msra.mxu0 %v201
    %263 = vmatprep.subr.bf16.mxu0 0
    %264 = vmatpush1.bf16.msra.mxu0 %v202
    %265 = vmatprep.subr.bf16.mxu0 0
    %266 = vmatpush1.bf16.msra.mxu0 %v203
    %267 = vmatprep.subr.bf16.mxu0 0
    %268 = vmatpush1.bf16.msra.mxu0 %v204
    %269 = vmatprep.subr.bf16.mxu0 0
    %270 = vmatpush1.bf16.msra.mxu0 %v205
    %271 = vmatprep.subr.bf16.mxu0 0
    %272 = vmatpush1.bf16.msra.mxu0 %v206
    %273 = vmatprep.subr.bf16.mxu0 0
    %274 = vmatpush1.bf16.msra.mxu0 %v207
    %275 = vmatprep.subr.bf16.mxu0 0
    %276 = vmatpush1.bf16.msra.mxu0 0
    %277 = vmatprep.subr.bf16.mxu0 0
    %278 = vmatpush1.bf16.msra.mxu0 0
    %279 = vmatprep.subr.bf16.mxu0 0
    %280 = vmatpush1.bf16.msra.mxu0 0
    %281 = vmatprep.subr.bf16.mxu0 0
    %282 = vmatpush1.bf16.msra.mxu0 0
    %283 = vmatprep.subr.bf16.mxu0 0
    %284 = vmatpush1.bf16.msra.mxu0 0
    %285 = vmatprep.subr.bf16.mxu0 0
    %286 = vmatpush1.bf16.msra.mxu0 0
    %287 = vmatprep.subr.bf16.mxu0 0
    %288 = vmatpush1.bf16.msra.mxu0 0
    %289 = vmatprep.subr.bf16.mxu0 0
    %290 = vmatpush1.bf16.msra.mxu0 0
    %291 = vmatprep.mubr.bf16.mxu0 0
    %292 = vmatmul.mubr.bf16.gmra.mrb[0].mxu0 %v258
    %v293 = vpop.f32.mrb[0].mxu0
    %v294 = vadd.f32 0.0, %v293
    %v295 = vpop.f32.mrb[0].mxu0
    %v296 = vpop.f32.mrb[0].mxu0
    %v297 = vpop.f32.mrb[0].mxu0
    %298 = vdwg.mxu0
    %v299 = vadd.f32 %v125, %v294
    %v300 = vtanh.pop %v299
    %v301 = vpack.c.bf16 %v300, %v300
    %302 = vmatprep.subr.bf16.mxu0 0
    %303 = vmatpush1.bf16.msra.mxu0 %v200
    %304 = vmatprep.subr.bf16.mxu0 0
    %305 = vmatpush1.bf16.msra.mxu0 %v201
    %306 = vmatprep.subr.bf16.mxu0 0
    %307 = vmatpush1.bf16.msra.mxu0 %v202
    %308 = vmatprep.subr.bf16.mxu0 0
    %309 = vmatpush1.bf16.msra.mxu0 %v203
    %310 = vmatprep.subr.bf16.mxu0 0
    %311 = vmatpush1.bf16.msra.mxu0 %v204
    %312 = vmatprep.subr.bf16.mxu0 0
    %313 = vmatpush1.bf16.msra.mxu0 %v205
    %314 = vmatprep.subr.bf16.mxu0 0
    %315 = vmatpush1.bf16.msra.mxu0 %v206
    %316 = vmatprep.subr.bf16.mxu0 0
    %317 = vmatpush1.bf16.msra.mxu0 %v207
    %318 = vmatprep.subr.bf16.mxu0 0
    %319 = vmatpush1.bf16.msra.mxu0 0
    %320 = vmatprep.subr.bf16.mxu0 0
    %321 = vmatpush1.bf16.msra.mxu0 0
    %322 = vmatprep.subr.bf16.mxu0 0
    %323 = vmatpush1.bf16.msra.mxu0 0
    %324 = vmatprep.subr.bf16.mxu0 0
    %325 = vmatpush1.bf16.msra.mxu0 0
    %326 = vmatprep.subr.bf16.mxu0 0
    %327 = vmatpush1.bf16.msra.mxu0 0
    %328 = vmatprep.subr.bf16.mxu0 0
    %329 = vmatpush1.bf16.msra.mxu0 0
    %330 = vmatprep.subr.bf16.mxu0 0
    %331 = vmatpush1.bf16.msra.mxu0 0
    %332 = vmatprep.subr.bf16.mxu0 0
    %333 = vmatpush1.bf16.msra.mxu0 0
    %334 = vmatprep.mubr.bf16.mxu0 0
    %335 = vmatmul.mubr.bf16.gmra.mrb[0].mxu0 %v301
    %v336 = vpop.f32.mrb[0].mxu0
    %v337 = vadd.f32 0.0, %v336
    %v338 = vpop.f32.mrb[0].mxu0
    %v339 = vpop.f32.mrb[0].mxu0
    %v340 = vpop.f32.mrb[0].mxu0
    %341 = vdwg.mxu0
    %v342 = vadd.f32 %v130, %v337
    %v343 = vtanh.pop %v342
    %v344 = vpack.c.bf16 %v343, %v343
    %345 = vmatprep.subr.bf16.mxu0 0
    %346 = vmatpush1.bf16.msra.mxu0 %v200
    %347 = vmatprep.subr.bf16.mxu0 0
    %348 = vmatpush1.bf16.msra.mxu0 %v201
    %349 = vmatprep.subr.bf16.mxu0 0
    %350 = vmatpush1.bf16.msra.mxu0 %v202
    %351 = vmatprep.subr.bf16.mxu0 0
    %352 = vmatpush1.bf16.msra.mxu0 %v203
    %353 = vmatprep.subr.bf16.mxu0 0
    %354 = vmatpush1.bf16.msra.mxu0 %v204
    %355 = vmatprep.subr.bf16.mxu0 0
    %356 = vmatpush1.bf16.msra.mxu0 %v205
    %357 = vmatprep.subr.bf16.mxu0 0
    %358 = vmatpush1.bf16.msra.mxu0 %v206
    %359 = vmatprep.subr.bf16.mxu0 0
    %360 = vmatpush1.bf16.msra.mxu0 %v207
    %361 = vmatprep.subr.bf16.mxu0 0
    %362 = vmatpush1.bf16.msra.mxu0 0
    %363 = vmatprep.subr.bf16.mxu0 0
    %364 = vmatpush1.bf16.msra.mxu0 0
    %365 = vmatprep.subr.bf16.mxu0 0
    %366 = vmatpush1.bf16.msra.mxu0 0
    %367 = vmatprep.subr.bf16.mxu0 0
    %368 = vmatpush1.bf16.msra.mxu0 0
    %369 = vmatprep.subr.bf16.mxu0 0
    %370 = vmatpush1.bf16.msra.mxu0 0
    %371 = vmatprep.subr.bf16.mxu0 0
    %372 = vmatpush1.bf16.msra.mxu0 0
    %373 = vmatprep.subr.bf16.mxu0 0
    %374 = vmatpush1.bf16.msra.mxu0 0
    %375 = vmatprep.subr.bf16.mxu0 0
    %376 = vmatpush1.bf16.msra.mxu0 0
    %377 = vmatprep.mubr.bf16.mxu0 0
    %378 = vmatmul.mubr.bf16.gmra.mrb[0].mxu0 %v344
    %v379 = vpop.f32.mrb[0].mxu0
    %v380 = vadd.f32 0.0, %v379
    %v381 = vpop.f32.mrb[0].mxu0
    %v382 = vpop.f32.mrb[0].mxu0
    %v383 = vpop.f32.mrb[0].mxu0
    %384 = vdwg.mxu0
    %v385 = vadd.f32 %v133, %v380
    %v386 = vtanh.pop %v385
    %v387 = vpack.c.bf16 %v386, %v386
    %388 = vmatprep.subr.bf16.mxu0 0
    %389 = vmatpush1.bf16.msra.mxu0 %v200
    %390 = vmatprep.subr.bf16.mxu0 0
    %391 = vmatpush1.bf16.msra.mxu0 %v201
    %392 = vmatprep.subr.bf16.mxu0 0
    %393 = vmatpush1.bf16.msra.mxu0 %v202
    %394 = vmatprep.subr.bf16.mxu0 0
    %395 = vmatpush1.bf16.msra.mxu0 %v203
    %396 = vmatprep.subr.bf16.mxu0 0
    %397 = vmatpush1.bf16.msra.mxu0 %v204
    %398 = vmatprep.subr.bf16.mxu0 0
    %399 = vmatpush1.bf16.msra.mxu0 %v205
    %400 = vmatprep.subr.bf16.mxu0 0
    %401 = vmatpush1.bf16.msra.mxu0 %v206
    %402 = vmatprep.subr.bf16.mxu0 0
    %403 = vmatpush1.bf16.msra.mxu0 %v207
    %404 = vmatprep.subr.bf16.mxu0 0
    %405 = vmatpush1.bf16.msra.mxu0 0
    %406 = vmatprep.subr.bf16.mxu0 0
    %407 = vmatpush1.bf16.msra.mxu0 0
    %408 = vmatprep.subr.bf16.mxu0 0
    %409 = vmatpush1.bf16.msra.mxu0 0
    %410 = vmatprep.subr.bf16.mxu0 0
    %411 = vmatpush1.bf16.msra.mxu0 0
    %412 = vmatprep.subr.bf16.mxu0 0
    %413 = vmatpush1.bf16.msra.mxu0 0
    %414 = vmatprep.subr.bf16.mxu0 0
    %415 = vmatpush1.bf16.msra.mxu0 0
    %416 = vmatprep.subr.bf16.mxu0 0
    %417 = vmatpush1.bf16.msra.mxu0 0
    %418 = vmatprep.subr.bf16.mxu0 0
    %419 = vmatpush1.bf16.msra.mxu0 0
    %420 = vmatprep.mubr.bf16.mxu0 0
    %421 = vmatmul.mubr.bf16.gmra.mrb[0].mxu0 %v387
    %v422 = vpop.f32.mrb[0].mxu0
    %v423 = vadd.f32 0.0, %v422
    %v424 = vpop.f32.mrb[0].mxu0
    %v425 = vpop.f32.mrb[0].mxu0
    %v426 = vpop.f32.mrb[0].mxu0
    %427 = vdwg.mxu0
    %v428 = vadd.f32 %v138, %v423
    %v429 = vtanh.pop %v428
    %v430 = vpack.c.bf16 %v429, %v429
    %431 = vmatprep.subr.bf16.mxu0 0
    %432 = vmatpush1.bf16.msra.mxu0 %v200
    %433 = vmatprep.subr.bf16.mxu0 0
    %434 = vmatpush1.bf16.msra.mxu0 %v201
    %435 = vmatprep.subr.bf16.mxu0 0
    %436 = vmatpush1.bf16.msra.mxu0 %v202
    %437 = vmatprep.subr.bf16.mxu0 0
    %438 = vmatpush1.bf16.msra.mxu0 %v203
    %439 = vmatprep.subr.bf16.mxu0 0
    %440 = vmatpush1.bf16.msra.mxu0 %v204
    %441 = vmatprep.subr.bf16.mxu0 0
    %442 = vmatpush1.bf16.msra.mxu0 %v205
    %443 = vmatprep.subr.bf16.mxu0 0
    %444 = vmatpush1.bf16.msra.mxu0 %v206
    %445 = vmatprep.subr.bf16.mxu0 0
    %446 = vmatpush1.bf16.msra.mxu0 %v207
    %447 = vmatprep.subr.bf16.mxu0 0
    %448 = vmatpush1.bf16.msra.mxu0 0
    %449 = vmatprep.subr.bf16.mxu0 0
    %450 = vmatpush1.bf16.msra.mxu0 0
    %451 = vmatprep.subr.bf16.mxu0 0
    %452 = vmatpush1.bf16.msra.mxu0 0
    %453 = vmatprep.subr.bf16.mxu0 0
    %454 = vmatpush1.bf16.msra.mxu0 0
    %455 = vmatprep.subr.bf16.mxu0 0
    %456 = vmatpush1.bf16.msra.mxu0 0
    %457 = vmatprep.subr.bf16.mxu0 0
    %458 = vmatpush1.bf16.msra.mxu0 0
    %459 = vmatprep.subr.bf16.mxu0 0
    %460 = vmatpush1.bf16.msra.mxu0 0
    %461 = vmatprep.subr.bf16.mxu0 0
    %462 = vmatpush1.bf16.msra.mxu0 0
    %463 = vmatprep.mubr.bf16.mxu0 0
    %464 = vmatmul.mubr.bf16.gmra.mrb[0].mxu0 %v430
    %v465 = vpop.f32.mrb[0].mxu0
    %v466 = vadd.f32 0.0, %v465
    %v467 = vpop.f32.mrb[0].mxu0
    %v468 = vpop.f32.mrb[0].mxu0
    %v469 = vpop.f32.mrb[0].mxu0
    %470 = vdwg.mxu0
    %v471 = vadd.f32 %v141, %v466
    %v472 = vtanh.pop %v471
    %v473 = vpack.c.bf16 %v472, %v472
    %474 = vmatprep.subr.bf16.mxu0 0
    %475 = vmatpush1.bf16.msra.mxu0 %v200
    %476 = vmatprep.subr.bf16.mxu0 0
    %477 = vmatpush1.bf16.msra.mxu0 %v201
    %478 = vmatprep.subr.bf16.mxu0 0
    %479 = vmatpush1.bf16.msra.mxu0 %v202
    %480 = vmatprep.subr.bf16.mxu0 0
    %481 = vmatpush1.bf16.msra.mxu0 %v203
    %482 = vmatprep.subr.bf16.mxu0 0
    %483 = vmatpush1.bf16.msra.mxu0 %v204
    %484 = vmatprep.subr.bf16.mxu0 0
    %485 = vmatpush1.bf16.msra.mxu0 %v205
    %486 = vmatprep.subr.bf16.mxu0 0
    %487 = vmatpush1.bf16.msra.mxu0 %v206
    %488 = vmatprep.subr.bf16.mxu0 0
    %489 = vmatpush1.bf16.msra.mxu0 %v207
    %490 = vmatprep.subr.bf16.mxu0 0
    %491 = vmatpush1.bf16.msra.mxu0 0
    %492 = vmatprep.subr.bf16.mxu0 0
    %493 = vmatpush1.bf16.msra.mxu0 0
    %494 = vmatprep.subr.bf16.mxu0 0
    %495 = vmatpush1.bf16.msra.mxu0 0
    %496 = vmatprep.subr.bf16.mxu0 0
    %497 = vmatpush1.bf16.msra.mxu0 0
    %498 = vmatprep.subr.bf16.mxu0 0
    %499 = vmatpush1.bf16.msra.mxu0 0
    %500 = vmatprep.subr.bf16.mxu0 0
    %501 = vmatpush1.bf16.msra.mxu0 0
    %502 = vmatprep.subr.bf16.mxu0 0
    %503 = vmatpush1.bf16.msra.mxu0 0
    %504 = vmatprep.subr.bf16.mxu0 0
    %505 = vmatpush1.bf16.msra.mxu0 0
    %506 = vmatprep.mubr.bf16.mxu0 0
    %507 = vmatmul.mubr.bf16.gmra.mrb[0].mxu0 %v473
    %v508 = vpop.f32.mrb[0].mxu0
    %v509 = vadd.f32 0.0, %v508
    %v510 = vpop.f32.mrb[0].mxu0
    %v511 = vpop.f32.mrb[0].mxu0
    %v512 = vpop.f32.mrb[0].mxu0
    %513 = vdwg.mxu0
    %v514 = vadd.f32 %v146, %v509
    %v515 = vtanh.pop %v514
    %v516 = vpack.c.bf16 %v515, %v515
    %517 = vmatprep.subr.bf16.mxu0 0
    %518 = vmatpush1.bf16.msra.mxu0 %v200
    %519 = vmatprep.subr.bf16.mxu0 0
    %520 = vmatpush1.bf16.msra.mxu0 %v201
    %521 = vmatprep.subr.bf16.mxu0 0
    %522 = vmatpush1.bf16.msra.mxu0 %v202
    %523 = vmatprep.subr.bf16.mxu0 0
    %524 = vmatpush1.bf16.msra.mxu0 %v203
    %525 = vmatprep.subr.bf16.mxu0 0
    %526 = vmatpush1.bf16.msra.mxu0 %v204
    %527 = vmatprep.subr.bf16.mxu0 0
    %528 = vmatpush1.bf16.msra.mxu0 %v205
    %529 = vmatprep.subr.bf16.mxu0 0
    %530 = vmatpush1.bf16.msra.mxu0 %v206
    %531 = vmatprep.subr.bf16.mxu0 0
    %532 = vmatpush1.bf16.msra.mxu0 %v207
    %533 = vmatprep.subr.bf16.mxu0 0
    %534 = vmatpush1.bf16.msra.mxu0 0
    %535 = vmatprep.subr.bf16.mxu0 0
    %536 = vmatpush1.bf16.msra.mxu0 0
    %537 = vmatprep.subr.bf16.mxu0 0
    %538 = vmatpush1.bf16.msra.mxu0 0
    %539 = vmatprep.subr.bf16.mxu0 0
    %540 = vmatpush1.bf16.msra.mxu0 0
    %541 = vmatprep.subr.bf16.mxu0 0
    %542 = vmatpush1.bf16.msra.mxu0 0
    %543 = vmatprep.subr.bf16.mxu0 0
    %544 = vmatpush1.bf16.msra.mxu0 0
    %545 = vmatprep.subr.bf16.mxu0 0
    %546 = vmatpush1.bf16.msra.mxu0 0
    %547 = vmatprep.subr.bf16.mxu0 0
    %548 = vmatpush1.bf16.msra.mxu0 0
    %549 = vmatprep.mubr.bf16.mxu0 0
    %550 = vmatmul.mubr.bf16.gmra.mrb[0].mxu0 %v516
    %v551 = vpop.f32.mrb[0].mxu0
    %v552 = vadd.f32 0.0, %v551
    %v553 = vpop.f32.mrb[0].mxu0
    %v554 = vpop.f32.mrb[0].mxu0
    %v555 = vpop.f32.mrb[0].mxu0
    %556 = vdwg.mxu0
    %v557 = vadd.f32 %v149, %v552
    %v558 = vtanh.pop %v557
    %v559 = vld [vmem:[#allocation2 + $0x4] sm:$0xf]
    %v560 = vld [vmem:[#allocation2 + $0x10] sm:$0xf]
    %v561 = vld [vmem:[#allocation2 + $0x1c] sm:$0xf]
    %v562 = vld [vmem:[#allocation2 + $0x28] sm:$0xf]
    %v563 = vld [vmem:[#allocation2 + $0x34] sm:$0xf]
    %v564 = vld [vmem:[#allocation2 + $0x40] sm:$0xf]
    %v565 = vld [vmem:[#allocation2 + $0x4c] sm:$0xf]
    %v566 = vld [vmem:[#allocation2 + $0x58] sm:$0xf]
    %v567 = vld [vmem:[#allocation2 + $0x64] sm:$0xf]
    %v568 = vld [vmem:[#allocation2 + $0x70] sm:$0xf]
    %v569 = vld [vmem:[#allocation2 + $0x7c] sm:$0xf]
    %v570 = vld [vmem:[#allocation2 + $0x88] sm:$0xf]
    %v571 = vld [vmem:[#allocation2 + $0x94] sm:$0xf]
    %v572 = vld [vmem:[#allocation2 + $0xa0] sm:$0xf]
    %v573 = vld [vmem:[#allocation2 + $0xac] sm:$0xf]
    %v574 = vld [vmem:[#allocation2 + $0xb8] sm:$0xf]
    %v575 = vpack.c.bf16 %v558, %v558
    %v576 = vlaneseq
    %v577 = vshrl.u32 %v576, 7
    %v578 = vsub.s32 1, %v577
    %v579 = vrot.slane %v33, %v578
    %v596 = vunpack.c.l.b16 %v559
    %v597 = vunpack.c.l.b16 %v560
    %v598 = vunpack.c.l.b16 %v561
    %v599 = vunpack.c.l.b16 %v562
    %v600 = vunpack.c.l.b16 %v563
    %v601 = vunpack.c.l.b16 %v564
    %v602 = vunpack.c.l.b16 %v565
    %v603 = vunpack.c.l.b16 %v566
    %v604 = vunpack.c.l.b16 %v567
    %v605 = vunpack.c.l.b16 %v568
    %v606 = vunpack.c.l.b16 %v569
    %v607 = vunpack.c.l.b16 %v570
    %v608 = vunpack.c.l.b16 %v571
    %v609 = vunpack.c.l.b16 %v572
    %v610 = vunpack.c.l.b16 %v573
    %v611 = vunpack.c.l.b16 %v574
    %v612 = vpack.c.b16 %v597, %v596
    %v613 = vpack.c.b16 %v599, %v598
    %v614 = vpack.c.b16 %v601, %v600
    %v615 = vpack.c.b16 %v603, %v602
    %v616 = vpack.c.b16 %v605, %v604
    %v617 = vpack.c.b16 %v607, %v606
    %v618 = vpack.c.b16 %v609, %v608
    %v619 = vpack.c.b16 %v611, %v610
    %628 = vmatprep.subr.bf16.mxu0 0
    %629 = vmatpush1.bf16.msra.mxu0 %v612
    %630 = vmatprep.subr.bf16.mxu0 0
    %631 = vmatpush1.bf16.msra.mxu0 %v613
    %632 = vmatprep.subr.bf16.mxu0 0
    %633 = vmatpush1.bf16.msra.mxu0 %v614
    %634 = vmatprep.subr.bf16.mxu0 0
    %635 = vmatpush1.bf16.msra.mxu0 %v615
    %636 = vmatprep.subr.bf16.mxu0 0
    %637 = vmatpush1.bf16.msra.mxu0 %v616
    %638 = vmatprep.subr.bf16.mxu0 0
    %639 = vmatpush1.bf16.msra.mxu0 %v617
    %640 = vmatprep.subr.bf16.mxu0 0
    %641 = vmatpush1.bf16.msra.mxu0 %v618
    %642 = vmatprep.subr.bf16.mxu0 0
    %643 = vmatpush1.bf16.msra.mxu0 %v619
    %644 = vmatprep.subr.bf16.mxu0 0
    %645 = vmatpush1.bf16.msra.mxu0 0
    %646 = vmatprep.subr.bf16.mxu0 0
    %647 = vmatpush1.bf16.msra.mxu0 0
    %648 = vmatprep.subr.bf16.mxu0 0
    %649 = vmatpush1.bf16.msra.mxu0 0
    %650 = vmatprep.subr.bf16.mxu0 0
    %651 = vmatpush1.bf16.msra.mxu0 0
    %652 = vmatprep.subr.bf16.mxu0 0
    %653 = vmatpush1.bf16.msra.mxu0 0
    %654 = vmatprep.subr.bf16.mxu0 0
    %655 = vmatpush1.bf16.msra.mxu0 0
    %656 = vmatprep.subr.bf16.mxu0 0
    %657 = vmatpush1.bf16.msra.mxu0 0
    %658 = vmatprep.subr.bf16.mxu0 0
    %659 = vmatpush1.bf16.msra.mxu0 0
    %660 = vmatprep.mubr.bf16.mxu0 0
    %661 = vmatmul.mubr.bf16.gmra.mrb[0].mxu0 %v575
    %v662 = vpop.f32.mrb[0].mxu0
    %v663 = vadd.f32 %v579, %v662
    %v664 = vpop.f32.mrb[0].mxu0
    %v665 = vpop.f32.mrb[0].mxu0
    %v666 = vpop.f32.mrb[0].mxu0
    %667 = vdwg.mxu0
    %v668 = vtanh.pop %v663
    %v669 = vld [vmem:[#allocation2 + $0x8] sm:$0xf]
    %v670 = vld [vmem:[#allocation2 + $0x14] sm:$0xf]
    %v671 = vld [vmem:[#allocation2 + $0x20] sm:$0xf]
    %v672 = vld [vmem:[#allocation2 + $0x2c] sm:$0xf]
    %v673 = vld [vmem:[#allocation2 + $0x38] sm:$0xf]
    %v674 = vld [vmem:[#allocation2 + $0x44] sm:$0xf]
    %v675 = vld [vmem:[#allocation2 + $0x50] sm:$0xf]
    %v676 = vld [vmem:[#allocation2 + $0x5c] sm:$0xf]
    %v677 = vld [vmem:[#allocation2 + $0x68] sm:$0xf]
    %v678 = vld [vmem:[#allocation2 + $0x74] sm:$0xf]
    %v679 = vld [vmem:[#allocation2 + $0x80] sm:$0xf]
    %v680 = vld [vmem:[#allocation2 + $0x8c] sm:$0xf]
    %v681 = vld [vmem:[#allocation2 + $0x98] sm:$0xf]
    %v682 = vld [vmem:[#allocation2 + $0xa4] sm:$0xf]
    %v683 = vld [vmem:[#allocation2 + $0xb0] sm:$0xf]
    %v684 = vld [vmem:[#allocation2 + $0xbc] sm:$0xf]
    %v685 = vpack.c.bf16 %v668, %v668
    %v686 = vlaneseq
    %v687 = vshrl.u32 %v686, 7
    %v688 = vsub.s32 2, %v687
    %v689 = vrot.slane %v33, %v688
    %v706 = vunpack.c.l.b16 %v669
    %v707 = vunpack.c.l.b16 %v670
    %v708 = vunpack.c.l.b16 %v671
    %v709 = vunpack.c.l.b16 %v672
    %v710 = vunpack.c.l.b16 %v673
    %v711 = vunpack.c.l.b16 %v674
    %v712 = vunpack.c.l.b16 %v675
    %v713 = vunpack.c.l.b16 %v676
    %v714 = vunpack.c.l.b16 %v677
    %v715 = vunpack.c.l.b16 %v678
    %v716 = vunpack.c.l.b16 %v679
    %v717 = vunpack.c.l.b16 %v680
    %v718 = vunpack.c.l.b16 %v681
    %v719 = vunpack.c.l.b16 %v682
    %v720 = vunpack.c.l.b16 %v683
    %v721 = vunpack.c.l.b16 %v684
    %v722 = vpack.c.b16 %v707, %v706
    %v723 = vpack.c.b16 %v709, %v708
    %v724 = vpack.c.b16 %v711, %v710
    %v725 = vpack.c.b16 %v713, %v712
    %v726 = vpack.c.b16 %v715, %v714
    %v727 = vpack.c.b16 %v717, %v716
    %v728 = vpack.c.b16 %v719, %v718
    %v729 = vpack.c.b16 %v721, %v720
    %738 = vmatprep.subr.bf16.mxu0 0
    %739 = vmatpush1.bf16.msra.mxu0 %v722
    %740 = vmatprep.subr.bf16.mxu0 0
    %741 = vmatpush1.bf16.msra.mxu0 %v723
    %742 = vmatprep.subr.bf16.mxu0 0
    %743 = vmatpush1.bf16.msra.mxu0 %v724
    %744 = vmatprep.subr.bf16.mxu0 0
    %745 = vmatpush1.bf16.msra.mxu0 %v725
    %746 = vmatprep.subr.bf16.mxu0 0
    %747 = vmatpush1.bf16.msra.mxu0 %v726
    %748 = vmatprep.subr.bf16.mxu0 0
    %749 = vmatpush1.bf16.msra.mxu0 %v727
    %750 = vmatprep.subr.bf16.mxu0 0
    %751 = vmatpush1.bf16.msra.mxu0 %v728
    %752 = vmatprep.subr.bf16.mxu0 0
    %753 = vmatpush1.bf16.msra.mxu0 %v729
    %754 = vmatprep.subr.bf16.mxu0 0
    %755 = vmatpush1.bf16.msra.mxu0 0
    %756 = vmatprep.subr.bf16.mxu0 0
    %757 = vmatpush1.bf16.msra.mxu0 0
    %758 = vmatprep.subr.bf16.mxu0 0
    %759 = vmatpush1.bf16.msra.mxu0 0
    %760 = vmatprep.subr.bf16.mxu0 0
    %761 = vmatpush1.bf16.msra.mxu0 0
    %762 = vmatprep.subr.bf16.mxu0 0
    %763 = vmatpush1.bf16.msra.mxu0 0
    %764 = vmatprep.subr.bf16.mxu0 0
    %765 = vmatpush1.bf16.msra.mxu0 0
    %766 = vmatprep.subr.bf16.mxu0 0
    %767 = vmatpush1.bf16.msra.mxu0 0
    %768 = vmatprep.subr.bf16.mxu0 0
    %769 = vmatpush1.bf16.msra.mxu0 0
    %770 = vmatprep.mubr.bf16.mxu0 0
    %771 = vmatmul.mubr.bf16.gmra.mrb[0].mxu0 %v685
    %v772 = vpop.f32.mrb[0].mxu0
    %v773 = vadd.f32 %v689, %v772
    %v774 = vpop.f32.mrb[0].mxu0
    %v775 = vpop.f32.mrb[0].mxu0
    %v776 = vpop.f32.mrb[0].mxu0
    %777 = vdwg.mxu0
    %vm778 = vcmask 17408
    %v779 = vsel %vm778, %v773, -inf
    %v780 = vrot.slane %v779, 4
    %v781 = vmax.f32 %v779, %v780
    %v782 = vrot.slane %v781, 2
    %v783 = vmax.f32 %v781, %v782
    %v784 = vrot.slane %v783, 1
    %v785 = vmax.f32 %v783, %v784
    %v786 = vsub.f32 %v773, %v785
    %v787 = vmul.f32 %v786, 1.442695
    %v788 = vpow.pop %v787
    %v789 = vsel %vm778, %v788, 0.0
    %v790 = vrot.slane %v789, 4
    %v791 = vadd.f32 %v789, %v790
    %v792 = vrot.slane %v791, 2
    %v793 = vadd.f32 %v791, %v792
    %v794 = vrot.slane %v793, 1
    %v795 = vadd.f32 %v793, %v794
    %v796 = vrcp.pop %v795
    %v797 = vmul.f32 %v788, %v796
    %798 = vst.msk [vmem:[#allocation5] sm:$0x3] %vm778, %v797
    // Predicated region
    $region22: #{dqn_rnn_forward.1} parent=1 // pred_check
      _
    $region23: #{dqn_rnn_forward.1} parent=1 // pred_check_branch
      %800 = sbr.rel (0) target = $region25
    $region24: #{dqn_rnn_forward.1} parent=1 // pred_region
      %s802 = ssub.s32 32, 32
      %803 = vsyncadd [#allocation4], %s802
      %s805 = sshll.u32 [#allocation5], 4
      %s806 = int_to_ptr.vmem [resolvable:$true] %s805
      %808 = dma.vmem_to_hbm [thread:$0]  %s806, 32, %s4, [#allocation4]
    $region25: #{dqn_rnn_forward.1} parent=1 // pred_fallthru
      _
    // Predicated region
    $region26: #{dqn_rnn_forward.1} parent=1 // pred_check
      _
    $region27: #{dqn_rnn_forward.1} parent=1 // pred_check_branch
      %810 = sbr.rel (0) target = $region29
    $region28: #{dqn_rnn_forward.1} parent=1 // pred_region
      %811 = dma.done [#allocation4], 32
    $region29: #{dqn_rnn_forward.1} parent=1 // pred_fallthru
      _
    %812 = vsyncpa [#allocation3], 1
    %813 = vsyncpa [#allocation4], 1

</llo_original>
